<compile_context>
chip_gen: v5e
topology: v5e:2x2
jax: 0.10.0
libtpu: 0.0.40
codegen_flags: <defaults>
</compile_context>

<pallas_src>
import jax
import jax.numpy as jnp
from jax.experimental import pallas as pl
from jax.experimental.pallas import tpu as pltpu

_BLOCK_BUDGET = 4 << 20  # ~4 MiB per pipelined input block


def _clamp_vmem(nbytes):
    # keep within every chip's physical VMEM (v7x has 64 MiB per TC)
    return int(min(max(nbytes, 32 << 20), 64 << 20))


# --------------------- is_pool=0: 1x1x1 conv on NCDHW -----------------------
def _conv_kernel(x_ref, w_ref, b_ref, o_ref):
    # x: (1, Cin, tP), w: (Cout, Cin), b: (Cout, 1) -> o: (1, Cout, tP)
    o_ref[0] = (jnp.dot(w_ref[...], x_ref[0],
                        preferred_element_type=jnp.float32)
                + b_ref[...]).astype(o_ref.dtype)


def _conv1x1_ncdhw(x3, w2, b2):
    """x3: (N, Cin, P) channels-first; w2: (Cout, Cin) f32; b2: (Cout, 1) f32."""
    N, Cin, P = x3.shape
    Cout = w2.shape[0]
    esize = jnp.dtype(x3.dtype).itemsize
    unit = (Cin + Cout) * 128 * esize            # bytes per 128 output lanes
    if P <= 128:
        tP = P                                    # full (allowed) block
    else:
        tP = min(P, max(1, _BLOCK_BUDGET // unit) * 128)
        tP = max(128, (tP // 128) * 128)          # lane-dense stores
    in_blk, out_blk = Cin * tP * esize, Cout * tP * esize
    wts = (Cout * Cin + Cout) * 4
    vlim = _clamp_vmem(3 * (in_blk + out_blk) + 2 * wts + (8 << 20))
    return pl.pallas_call(
        _conv_kernel,
        out_shape=jax.ShapeDtypeStruct((N, Cout, P), x3.dtype),
        grid=(N, pl.cdiv(P, tP)),
        in_specs=[
            pl.BlockSpec((1, Cin, tP), lambda n, p: (n, 0, p)),
            pl.BlockSpec((Cout, Cin), lambda n, p: (0, 0)),
            pl.BlockSpec((Cout, 1), lambda n, p: (0, 0)),
        ],
        out_specs=pl.BlockSpec((1, Cout, tP), lambda n, p: (n, 0, p)),
        compiler_params=pltpu.CompilerParams(
            dimension_semantics=("parallel", "parallel"),
            vmem_limit_bytes=vlim),
    )(x3, w2, b2)


# ------------- is_pool=1: fused AvgPool3d(2,2) + 1x1x1 conv -----------------
def _pool_conv_kernel(x_ref, pw_ref, w_ref, b_ref, o_ref):
    # x : (1, Cin, 1, 2, tH, W2)  one depth-pair, tH = 2*tHo input rows
    # pw: (W2, Wo)   0/1 width-pair pooling matrix
    # w : (Cout, Cin) conv weight pre-scaled by 1/8
    # b : (Cout, 1)
    # o : (1, Cout, 1, tHo, Wo)
    Cin, tH, W2 = x_ref.shape[1], x_ref.shape[4], x_ref.shape[5]
    Cout, tHo, Wo = o_ref.shape[1], o_ref.shape[3], o_ref.shape[4]
    # depth-pair sum: leading block axis -> plain VPU adds, no relayout
    xd = (x_ref[0, :, 0, 0].astype(jnp.float32)
          + x_ref[0, :, 0, 1].astype(jnp.float32))            # (Cin, tH, W2)
    # width-pair sum on the MXU (keeps the lane dim dense, MXU has huge slack)
    zw = jnp.dot(xd.reshape(Cin * tH, W2), pw_ref[...],
                 preferred_element_type=jnp.float32)           # (Cin*tH, Wo)
    # height-pair sum
    z4 = zw.reshape(Cin, tHo, 2, Wo)
    zh = z4[:, :, 0, :] + z4[:, :, 1, :]                       # (Cin, tHo, Wo)
    # 1x1x1 conv; 1/8 average already folded into w, single bias add
    out = (jnp.dot(w_ref[...], zh.reshape(Cin, tHo * Wo),
                   preferred_element_type=jnp.float32)
           + b_ref[...])                                       # (Cout, tHo*Wo)
    o_ref[0, :, 0] = out.reshape(Cout, tHo, Wo).astype(o_ref.dtype)


def transition_forward(x, weight, bias, is_pool=1):
    """Transition forward.  x: (N, Cin, D, H, W) NCDHW;
    weight: (Cout, Cin, 1, 1, 1); bias: (Cout,).  Returns NCDHW output."""
    N, Cin, D, H, W = x.shape
    Cout = weight.shape[0]
    w2 = weight.reshape(Cout, Cin).astype(jnp.float32)
    b2 = bias.reshape(Cout, 1).astype(jnp.float32)

    if not is_pool:
        out = _conv1x1_ncdhw(x.reshape(N, Cin, D * H * W), w2, b2)
        return out.reshape(N, Cout, D, H, W)

    # AvgPool3d(kernel=2, stride=2) floors odd spatial dims.
    Do, Ho, Wo = D // 2, H // 2, W // 2
    D2, H2, W2 = 2 * Do, 2 * Ho, 2 * Wo
    if (D2, H2, W2) != (D, H, W):
        x = x[:, :, :D2, :H2, :W2]
    # Free row-major view exposing the depth pair as its own axis.
    x6 = x.reshape(N, Cin, Do, 2, H2, W2)

    esize = jnp.dtype(x.dtype).itemsize
    row_bytes = Cin * 4 * W2 * esize          # input bytes per output row
    if Ho <= 8 or Ho * row_bytes <= _BLOCK_BUDGET:
        tHo = Ho                               # full H block (any size allowed)
    else:                                      # tile H: multiple of 8 rows
        tHo = int(min(Ho, max(8, (_BLOCK_BUDGET // row_bytes) // 8 * 8)))
    tH = 2 * tHo

    # 0/1 matrix that sums width pairs; the 1/8 average goes into the weight.
    pw = (jnp.arange(W2)[:, None] // 2
          == jnp.arange(Wo)[None, :]).astype(jnp.float32)      # (W2, Wo)
    wp = w2 * 0.125

    in_blk = Cin * 2 * tH * W2 * esize
    out_blk = Cout * tHo * Wo * esize
    wts = (Cout * Cin + W2 * Wo + Cout) * 4
    vlim = _clamp_vmem(6 * in_blk + 4 * out_blk + 2 * wts + (8 << 20))
    # TODO(synk): add a Cin-reduction grid axis + f32 accumulator if
    # Cin*2*tH*W2 ever exceeds the VMEM budget at tHo == 8.

    return pl.pallas_call(
        _pool_conv_kernel,
        out_shape=jax.ShapeDtypeStruct((N, Cout, Do, Ho, Wo), x.dtype),
        grid=(N, Do, pl.cdiv(Ho, tHo)),
        in_specs=[
            pl.BlockSpec((1, Cin, 1, 2, tH, W2),
                         lambda n, d, h: (n, 0, d, 0, h, 0)),
            pl.BlockSpec((W2, Wo), lambda n, d, h: (0, 0)),
            pl.BlockSpec((Cout, Cin), lambda n, d, h: (0, 0)),
            pl.BlockSpec((Cout, 1), lambda n, d, h: (0, 0)),
        ],
        out_specs=pl.BlockSpec((1, Cout, 1, tHo, Wo),
                               lambda n, d, h: (n, 0, d, h, 0)),
        compiler_params=pltpu.CompilerParams(
            dimension_semantics=("parallel", "parallel", "parallel"),
            vmem_limit_bytes=vlim),
    )(x6, pw, wp, b2)


def _reference(x, weight, bias, is_pool=1):
    """Pure-JAX reference mirroring the PyTorch module semantics."""
    Cout = weight.shape[0]
    w2 = weight.reshape(Cout, weight.shape[1])
    y = jnp.einsum('ncdhw,oc->nodhw', x, w2) + bias.reshape(1, Cout, 1, 1, 1)
    if is_pool:
        n, c, d, h, w = y.shape
        y = y.reshape(n, c, d // 2, 2, h // 2, 2, w // 2, 2).mean(axis=(3, 5, 7))
    return y


if __name__ == "__main__":
    key = jax.random.PRNGKey(0)
    kx, kw, kb = jax.random.split(key, 3)

    N, Cin, Cout, D, H, W = 2, 4, 8, 8, 8, 8
    x = jax.random.normal(kx, (N, Cin, D, H, W), dtype=jnp.float32)
    weight = jax.random.normal(kw, (Cout, Cin, 1, 1, 1), dtype=jnp.float32) * 0.1
    bias = jax.random.normal(kb, (Cout,), dtype=jnp.float32) * 0.1

    fwd = jax.jit(transition_forward, static_argnames=("is_pool",))

    # is_pool=1 (module default): fused pool + conv kernel
    out = jax.block_until_ready(fwd(x, weight, bias, is_pool=1))
    ref = _reference(x, weight, bias, is_pool=1)
    assert out.shape == (N, Cout, D // 2, H // 2, W // 2), out.shape
    assert jnp.allclose(out, ref, rtol=1e-4, atol=1e-4), \
        float(jnp.max(jnp.abs(out - ref)))

    # is_pool=0 path: plain NCDHW pointwise conv kernel
    out_np = jax.block_until_ready(fwd(x, weight, bias, is_pool=0))
    ref_np = _reference(x, weight, bias, is_pool=0)
    assert out_np.shape == (N, Cout, D, H, W), out_np.shape
    assert jnp.allclose(out_np, ref_np, rtol=1e-4, atol=1e-4), \
        float(jnp.max(jnp.abs(out_np - ref_np)))

    print("KERNEL_OK")
</pallas_src>

<mosaic_0001>
module attributes {stable_mosaic.version = 11 : i64} {
  func.func @_pool_conv_kernel(%arg0: i32, %arg1: i32, %arg2: i32, %arg3: memref<1x4x1x2x8x8xf32, #tpu.memory_space<vmem>>, %arg4: memref<8x4xf32, #tpu.memory_space<vmem>>, %arg5: memref<8x4xf32, #tpu.memory_space<vmem>>, %arg6: memref<8x1xf32, #tpu.memory_space<vmem>>, %arg7: memref<1x8x1x4x4xf32, #tpu.memory_space<vmem>>) attributes {dimension_semantics = [#tpu.dimension_semantics<parallel>, #tpu.dimension_semantics<parallel>, #tpu.dimension_semantics<parallel>], iteration_bounds = array<i64: 2, 4, 1>, scalar_prefetch = 0 : i64, scratch_operands = 0 : i64, tpu.core_type = #tpu.core_type<tc>, window_params = [{transform_indices = @transform_0, window_bounds = array<i64: 1, 4, 1, 2, 8, 8>}, {pipeline_mode = #tpu.pipeline_mode<synchronous>, transform_indices = @transform_1, window_bounds = array<i64: 8, 4>}, {pipeline_mode = #tpu.pipeline_mode<synchronous>, transform_indices = @transform_2, window_bounds = array<i64: 8, 4>}, {pipeline_mode = #tpu.pipeline_mode<synchronous>, transform_indices = @transform_3, window_bounds = array<i64: 8, 1>}, {transform_indices = @transform_4, window_bounds = array<i64: 1, 8, 1, 4, 4>}]} {
    %c0 = arith.constant 0 : index
    %c0_0 = arith.constant 0 : index
    %c0_1 = arith.constant 0 : index
    %c0_2 = arith.constant 0 : index
    %c0_3 = arith.constant 0 : index
    %c0_4 = arith.constant 0 : index
    %0 = vector.load %arg3[%c0, %c0_0, %c0_1, %c0_2, %c0_3, %c0_4] : memref<1x4x1x2x8x8xf32, #tpu.memory_space<vmem>>, vector<1x4x1x1x8x8xf32>
    %1 = vector.shape_cast %0 : vector<1x4x1x1x8x8xf32> to vector<4x8x8xf32>
    %c0_5 = arith.constant 0 : index
    %c0_6 = arith.constant 0 : index
    %c0_7 = arith.constant 0 : index
    %c1 = arith.constant 1 : index
    %c0_8 = arith.constant 0 : index
    %c0_9 = arith.constant 0 : index
    %2 = vector.load %arg3[%c0_5, %c0_6, %c0_7, %c1, %c0_8, %c0_9] : memref<1x4x1x2x8x8xf32, #tpu.memory_space<vmem>>, vector<1x4x1x1x8x8xf32>
    %3 = vector.shape_cast %2 : vector<1x4x1x1x8x8xf32> to vector<4x8x8xf32>
    %4 = arith.addf %1, %3 : vector<4x8x8xf32>
    %5 = vector.shape_cast %4 : vector<4x8x8xf32> to vector<32x8xf32>
    %c0_10 = arith.constant 0 : index
    %c0_11 = arith.constant 0 : index
    %6 = vector.load %arg4[%c0_10, %c0_11] : memref<8x4xf32, #tpu.memory_space<vmem>>, vector<8x4xf32>
    %cst = arith.constant dense<0.000000e+00> : vector<32x4xf32>
    %7 = tpu.matmul %5, %6, %cst {dimension_numbers = #tpu.dot_dimension_numbers<[1], [0], [0], [1], [0, 0, 1, 1], [], []>} : vector<32x8xf32>, vector<8x4xf32>, vector<32x4xf32> -> vector<32x4xf32>
    %8 = vector.shape_cast %7 : vector<32x4xf32> to vector<4x4x2x4xf32>
    %9 = vector.extract_strided_slice %8 {offsets = [0, 0, 0, 0], sizes = [4, 4, 1, 4], strides = [1, 1, 1, 1]} : vector<4x4x2x4xf32> to vector<4x4x1x4xf32>
    %10 = vector.shape_cast %9 : vector<4x4x1x4xf32> to vector<4x4x4xf32>
    %11 = vector.extract_strided_slice %8 {offsets = [0, 0, 1, 0], sizes = [4, 4, 1, 4], strides = [1, 1, 1, 1]} : vector<4x4x2x4xf32> to vector<4x4x1x4xf32>
    %12 = vector.shape_cast %11 : vector<4x4x1x4xf32> to vector<4x4x4xf32>
    %13 = arith.addf %10, %12 : vector<4x4x4xf32>
    %c0_12 = arith.constant 0 : index
    %c0_13 = arith.constant 0 : index
    %14 = vector.load %arg5[%c0_12, %c0_13] : memref<8x4xf32, #tpu.memory_space<vmem>>, vector<8x4xf32>
    %15 = vector.shape_cast %13 : vector<4x4x4xf32> to vector<4x16xf32>
    %cst_14 = arith.constant dense<0.000000e+00> : vector<8x16xf32>
    %16 = tpu.matmul %14, %15, %cst_14 {dimension_numbers = #tpu.dot_dimension_numbers<[1], [0], [0], [1], [0, 0, 1, 1], [], []>} : vector<8x4xf32>, vector<4x16xf32>, vector<8x16xf32> -> vector<8x16xf32>
    %c0_15 = arith.constant 0 : index
    %c0_16 = arith.constant 0 : index
    %17 = vector.load %arg6[%c0_15, %c0_16] : memref<8x1xf32, #tpu.memory_space<vmem>>, vector<8x1xf32>
    %18 = vector.broadcast %17 : vector<8x1xf32> to vector<8x16xf32>
    %19 = arith.addf %16, %18 : vector<8x16xf32>
    %20 = vector.shape_cast %19 : vector<8x16xf32> to vector<8x4x4xf32>
    %c0_17 = arith.constant 0 : index
    %c0_18 = arith.constant 0 : index
    %c0_19 = arith.constant 0 : index
    %c0_20 = arith.constant 0 : index
    %c0_21 = arith.constant 0 : index
    %21 = vector.load %arg7[%c0_17, %c0_18, %c0_19, %c0_20, %c0_21] : memref<1x8x1x4x4xf32, #tpu.memory_space<vmem>>, vector<1x8x1x4x4xf32>
    %22 = vector.shape_cast %21 : vector<1x8x1x4x4xf32> to vector<8x4x4xf32>
    %23 = vector.shape_cast %20 : vector<8x4x4xf32> to vector<1x8x1x4x4xf32>
    tpu.vector_store %arg7[%c0_17, %c0_18, %c0_19, %c0_20, %c0_21], %23 {strides = array<i32>} : memref<1x8x1x4x4xf32, #tpu.memory_space<vmem>>, vector<1x8x1x4x4xf32>,
    return
  }
  func.func @transform_0(%arg0: i32, %arg1: i32, %arg2: i32) -> (i32, i32, i32, i32, i32, i32) {
    %c0_i32 = arith.constant 0 : i32
    %c0_i32_0 = arith.constant 0 : i32
    %c0_i32_1 = arith.constant 0 : i32
    %c0_i32_2 = arith.constant 0 : i32
    return %arg0, %c0_i32, %arg1, %c0_i32_0, %arg2, %c0_i32_1 : i32, i32, i32, i32, i32, i32
  }
  func.func @transform_1(%arg0: i32, %arg1: i32, %arg2: i32) -> (i32, i32) {
    %c0_i32 = arith.constant 0 : i32
    %c0_i32_0 = arith.constant 0 : i32
    %c0_i32_1 = arith.constant 0 : i32
    return %c0_i32, %c0_i32_0 : i32, i32
  }
  func.func @transform_2(%arg0: i32, %arg1: i32, %arg2: i32) -> (i32, i32) {
    %c0_i32 = arith.constant 0 : i32
    %c0_i32_0 = arith.constant 0 : i32
    %c0_i32_1 = arith.constant 0 : i32
    return %c0_i32, %c0_i32_0 : i32, i32
  }
  func.func @transform_3(%arg0: i32, %arg1: i32, %arg2: i32) -> (i32, i32) {
    %c0_i32 = arith.constant 0 : i32
    %c0_i32_0 = arith.constant 0 : i32
    %c0_i32_1 = arith.constant 0 : i32
    return %c0_i32, %c0_i32_0 : i32, i32
  }
  func.func @transform_4(%arg0: i32, %arg1: i32, %arg2: i32) -> (i32, i32, i32, i32, i32) {
    %c0_i32 = arith.constant 0 : i32
    %c0_i32_0 = arith.constant 0 : i32
    %c0_i32_1 = arith.constant 0 : i32
    return %arg0, %c0_i32, %arg1, %arg2, %c0_i32_0 : i32, i32, i32, i32, i32
  }
}

</mosaic_0001>

<llo_original>
// kernel: transition_forward.1
$region0: #{transition_forward.1}
  #allocation0 [shape = 'u32[]', space=smem, size = 0x4, offset = 0x4, fixed_abs, tag = 'smem constant byte address 0x4 - core index']
  #allocation1 [shape = 'u32[72,128]{1,0:T(1,128)}', space=vmem, size = 0x9000, scoped, tag = 'internal scratch']
  #allocation5 [shape = 's32[]', space=sflag, size = 0x4, offset = 0, fixed_abs, tag = 'sflag constant byte address 0x0 - dummy sync flag']
  %s0 = inlined_call_operand.hbm [shape: f32[2,4,4,2,8,8], index: 0, kind: input, shape index: {}]
  %s1 = inlined_call_operand.vmem [shape: f32[8,4], index: 1, kind: input, shape index: {}]
  %s2 = inlined_call_operand.vmem [shape: f32[8,4], index: 2, kind: input, shape index: {}]
  %s3 = inlined_call_operand.vmem [shape: f32[8,1], index: 3, kind: input, shape index: {}]
  %s4 = inlined_call_operand.vmem [shape: f32[2,8,4,4,4], index: 4, kind: output, shape index: {}]
  %s5 = sld [smem:[#allocation0]]
  $region90: #{transition_forward.1} parent=0
    _
  %s7 = ssub.s32 1, %s5
  %s8 = scalar_select 0, %s7, %s5
  $region1: #{transition_forward.1} parent=0
    #allocation2 [shape = 'u8[65536]{0}', space=vmem, size = 0x10000, scoped, tag = 'input window, operand 0']
    #allocation3 [shape = 's32[2]{0}', space=sflag, size = 0x8, scoped, tag = 'scoped memory for transition_forward.1']
    #allocation4 [shape = 'u8[32768]{0}', space=vmem, size = 0x8000, scoped, tag = 'output window, operand 0']
    %9 = vsyncpa [#allocation3], 0
    %s10 = scalar_lea.sflag [#allocation3], 1
    %11 = vsyncpa %s10, 0
    loop: start=0, step=1, limit=10
    $region2: #{transition_forward.1} parent=1 // loop_pre_header
      _
    $region3: #{transition_forward.1} parent=1 // loop_header
      %s13 = sphi 0, %s17
      %p14 = scmp.ge.s32.totalorder %s13, 10
      %s20 = sphi 0, %s39
      %s21 = sphi 0, %s35
      %s22 = sphi 0, %s31
      %s23 = sphi 0, %s20
      %s24 = sphi 0, %s21
      %s25 = sphi 0, %s22
      %s26 = sphi 0, %s23
      %s27 = sphi 0, %s24
      %s28 = sphi 0, %s25
      %s46 = sphi 0, %s48
      %s49 = sphi 0, %s46
      %s50 = sphi 0, %s49
      %s66 = sphi 0, %s50
      %s70 = sphi 0, %s70
      %s72 = sphi 0, %s70
      %s73 = sphi 0, %s72
      %s87 = sphi 0, %s73
      %s91 = sphi 0, %s91
      %s93 = sphi 0, %s91
      %s94 = sphi 0, %s93
      %s108 = sphi 0, %s94
      %s112 = sphi 0, %s112
      %s114 = sphi 0, %s112
      %s115 = sphi 0, %s114
      %s129 = sphi 0, %s115
      %s139 = sphi 0, %s141
      %s142 = sphi 0, %s139
      %s143 = sphi 0, %s142
      %s159 = sphi 0, %s143
    $region4: #{transition_forward.1} parent=1 // loop_header_branch
      %16 = sbr.rel (%p14) target = $region8
    $region5: #{transition_forward.1} parent=1 // loop_body
      %s18 = ssub.s32 %s13, 1
      %s19 = ssub.s32 %s13, 2
      %s29 = sadd.s32 1, %s22
      %p30 = scmp.ge.s32.totalorder %s29, 1
      %s31 = scalar_select %p30, 0, %s29
      %s32 = sadd.s32 1, %s21
      %s33 = scalar_select %p30, %s32, %s21
      %p34 = scmp.ge.s32.totalorder %s33, 4
      %s35 = scalar_select %p34, 0, %s33
      %s36 = sadd.s32 1, %s20
      %s37 = scalar_select %p34, %s36, %s20
      %p38 = scmp.ge.s32.totalorder %s37, 2
      %s39 = scalar_select %p38, 0, %s37
      %s40 = ssub.s32 %s20, %s39
      %s41 = ssub.s32 %s21, %s35
      %s42 = sor.u32 %s40, %s41
      %s43 = ssub.s32 %s22, %s31
      %s44 = sor.u32 %s42, %s43
      %p45 = scmp.eq.s32.totalorder %s44, 0
      %s47 = sadd.s32 %s46, 1
      %s48 = scalar_select %p45, %s46, %s47
      %p51 = pneg %p45
      %p52 = scmp.eq.s32.totalorder %s13, 7
      %p53 = por %p51, %p52
      %p54 = scmp.ne.s32.totalorder %s46, %s49
      %p55 = scmp.eq.s32.totalorder %s13, 0
      %p56 = por %p54, %p55
      %p57 = scmp.ne.s32.totalorder %s46, %s49
      %p58 = scmp.eq.s32.totalorder %s18, 7
      %p59 = por %p57, %p58
      %p60 = scmp.ne.s32.totalorder %s49, %s50
      %p61 = scmp.eq.s32.totalorder %s18, 0
      %p62 = por %p60, %p61
      %p63 = scmp.ne.s32.totalorder %s49, %s50
      %p64 = scmp.eq.s32.totalorder %s19, 7
      %p65 = por %p63, %p64
      %p67 = scmp.ne.s32.totalorder %s50, %s66
      %p68 = scmp.eq.s32.totalorder %s19, 0
      %p69 = por %p67, %p68
      %s71 = sadd.s32 %s70, 1
      %p74 = scmp.eq.s32.totalorder %s13, 7
      %p75 = scmp.ne.s32.totalorder %s70, %s72
      %p76 = scmp.eq.s32.totalorder %s13, 0
      %p77 = por %p75, %p76
      %p78 = scmp.ne.s32.totalorder %s70, %s72
      %p79 = scmp.eq.s32.totalorder %s18, 7
      %p80 = por %p78, %p79
      %p81 = scmp.ne.s32.totalorder %s72, %s73
      %p82 = scmp.eq.s32.totalorder %s18, 0
      %p83 = por %p81, %p82
      %p84 = scmp.ne.s32.totalorder %s72, %s73
      %p85 = scmp.eq.s32.totalorder %s19, 7
      %p86 = por %p84, %p85
      %p88 = scmp.ne.s32.totalorder %s73, %s87
      %p89 = scmp.eq.s32.totalorder %s19, 0
      %p90 = por %p88, %p89
      %s92 = sadd.s32 %s91, 1
      %p95 = scmp.eq.s32.totalorder %s13, 7
      %p96 = scmp.ne.s32.totalorder %s91, %s93
      %p97 = scmp.eq.s32.totalorder %s13, 0
      %p98 = por %p96, %p97
      %p99 = scmp.ne.s32.totalorder %s91, %s93
      %p100 = scmp.eq.s32.totalorder %s18, 7
      %p101 = por %p99, %p100
      %p102 = scmp.ne.s32.totalorder %s93, %s94
      %p103 = scmp.eq.s32.totalorder %s18, 0
      %p104 = por %p102, %p103
      %p105 = scmp.ne.s32.totalorder %s93, %s94
      %p106 = scmp.eq.s32.totalorder %s19, 7
      %p107 = por %p105, %p106
      %p109 = scmp.ne.s32.totalorder %s94, %s108
      %p110 = scmp.eq.s32.totalorder %s19, 0
      %p111 = por %p109, %p110
      %s113 = sadd.s32 %s112, 1
      %p116 = scmp.eq.s32.totalorder %s13, 7
      %p117 = scmp.ne.s32.totalorder %s112, %s114
      %p118 = scmp.eq.s32.totalorder %s13, 0
      %p119 = por %p117, %p118
      %p120 = scmp.ne.s32.totalorder %s112, %s114
      %p121 = scmp.eq.s32.totalorder %s18, 7
      %p122 = por %p120, %p121
      %p123 = scmp.ne.s32.totalorder %s114, %s115
      %p124 = scmp.eq.s32.totalorder %s18, 0
      %p125 = por %p123, %p124
      %p126 = scmp.ne.s32.totalorder %s114, %s115
      %p127 = scmp.eq.s32.totalorder %s19, 7
      %p128 = por %p126, %p127
      %p130 = scmp.ne.s32.totalorder %s115, %s129
      %p131 = scmp.eq.s32.totalorder %s19, 0
      %p132 = por %p130, %p131
      %s133 = ssub.s32 %s20, %s39
      %s134 = ssub.s32 %s21, %s35
      %s135 = sor.u32 %s133, %s134
      %s136 = ssub.s32 %s22, %s31
      %s137 = sor.u32 %s135, %s136
      %p138 = scmp.eq.s32.totalorder %s137, 0
      %s140 = sadd.s32 %s139, 1
      %s141 = scalar_select %p138, %s139, %s140
      %p144 = pneg %p138
      %p145 = scmp.eq.s32.totalorder %s13, 7
      %p146 = por %p144, %p145
      %p147 = scmp.ne.s32.totalorder %s139, %s142
      %p148 = scmp.eq.s32.totalorder %s13, 0
      %p149 = por %p147, %p148
      %p150 = scmp.ne.s32.totalorder %s139, %s142
      %p151 = scmp.eq.s32.totalorder %s18, 7
      %p152 = por %p150, %p151
      %p153 = scmp.ne.s32.totalorder %s142, %s143
      %p154 = scmp.eq.s32.totalorder %s18, 0
      %p155 = por %p153, %p154
      %p156 = scmp.ne.s32.totalorder %s142, %s143
      %p157 = scmp.eq.s32.totalorder %s19, 7
      %p158 = por %p156, %p157
      %p160 = scmp.ne.s32.totalorder %s143, %s159
      %p161 = scmp.eq.s32.totalorder %s19, 0
      %p162 = por %p160, %p161
      %p163 = scmp.le.s32.totalorder 1, %s13
      %p164 = scmp.lt.s32.totalorder %s13, 9
      %p165 = pnand %p163, %p164
      %p166 = pneg %p165
      // Predicated region
      $region9: #{transition_forward.1} parent=5 // pred_check
        _
      $region10: #{transition_forward.1} parent=5 // pred_check_branch
        %168 = sbr.rel (%p165) target = $region12
      $region11: #{transition_forward.1} parent=5 // pred_region
        %s169 = ssub.s32 %s13, 1
        // Predicated region
        $region13: #{transition_forward.1} parent=11 // pred_check
          %p170 = pneg %p83
        $region14: #{transition_forward.1} parent=11 // pred_check_branch
          %172 = sbr.rel (%p170) target = $region16
        $region15: #{transition_forward.1} parent=11 // pred_region
          _
        $region16: #{transition_forward.1} parent=11 // pred_fallthru
          _
        // Predicated region
        $region17: #{transition_forward.1} parent=11 // pred_check
          %p173 = pneg %p104
        $region18: #{transition_forward.1} parent=11 // pred_check_branch
          %175 = sbr.rel (%p173) target = $region20
        $region19: #{transition_forward.1} parent=11 // pred_region
          _
        $region20: #{transition_forward.1} parent=11 // pred_fallthru
          _
        // Predicated region
        $region21: #{transition_forward.1} parent=11 // pred_check
          %p176 = pneg %p125
        $region22: #{transition_forward.1} parent=11 // pred_check_branch
          %178 = sbr.rel (%p176) target = $region24
        $region23: #{transition_forward.1} parent=11 // pred_region
          _
        $region24: #{transition_forward.1} parent=11 // pred_fallthru
          _
      $region12: #{transition_forward.1} parent=5 // pred_fallthru
        _
      %p179 = scmp.lt.s32.totalorder %s13, 8
      // Predicated region
      $region25: #{transition_forward.1} parent=5 // pred_check
        %p180 = pneg %p179
      $region26: #{transition_forward.1} parent=5 // pred_check_branch
        %182 = sbr.rel (%p180) target = $region28
      $region27: #{transition_forward.1} parent=5 // pred_region
        // Predicated region
        $region29: #{transition_forward.1} parent=27 // pred_check
          %p183 = pneg %p56
        $region30: #{transition_forward.1} parent=27 // pred_check_branch
          %185 = sbr.rel (%p183) target = $region32
        $region31: #{transition_forward.1} parent=27 // pred_region
          #allocation6 [shape = 'u32[6]{0}', space=smem, size = 0x18, scoped, tag = 'DMA stride descriptor']
          %s186 = sand.u32 %s46, 1
          %s187 = scalar_lea.sflag [#allocation3], %s186
          %s188 = sand.u32 %s46, 1
          %s189 = smul.addr %s188, 64
          %s190 = scalar_lea.vmem [#allocation2], %s189
          %192 = vsyncadd %s187, 0
          %s193 = smul.addr %s21, 2
          %s194 = sadd.s32 %s22, %s193
          %s195 = smul.addr %s20, 32
          %s196 = sadd.s32 %s194, %s195
          %s197 = smul.addr %s196, 8
          %s198 = scalar_lea.hbm %s0, %s197
          %s200 = sshll.u32 1, 14
          %s201 = sxor.u32 4294967295, %s200
          %s203 = sld [smem:[#allocation0]]
          %s204 = sadd.s32 2, %s203
          %s206 = sshll.u32 7, 26
          %s207 = sxor.u32 4294967295, %s206
          %s208 = sand.u32 0, %s207
          %s209 = sshll.u32 %s204, 26
          %s210 = sor.u32 %s208, %s209
          %s211 = sshll.u32 %s198, 4
          %s212 = int_to_ptr.hbm [resolvable:$true] %s211
          %s213 = sshll.u32 %s190, 4
          %s214 = int_to_ptr.vmem [resolvable:$true] %s213
          %220 = sst [smem:[#allocation6]] 1024
          %s221 = scalar_lea.smem [#allocation6], 1
          %222 = sst [smem:[%s221]] 256
          %s223 = scalar_lea.smem [#allocation6], 2
          %224 = sst [smem:[%s223]] 2
          %s225 = scalar_lea.smem [#allocation6], 3
          %226 = sst [smem:[%s225]] 128
          %s227 = scalar_lea.smem [#allocation6], 4
          %228 = sst [smem:[%s227]] 128
          %s229 = scalar_lea.smem [#allocation6], 5
          %230 = sst [smem:[%s229]] 8
          %232 = dma.general %s212, 1024, %s214, %s187, [#allocation5], [#allocation6], %s210, 0
        $region32: #{transition_forward.1} parent=27 // pred_fallthru
          _
      $region28: #{transition_forward.1} parent=5 // pred_fallthru
        _
      %p233 = scmp.le.s32.totalorder 1, %s13
      %p234 = scmp.lt.s32.totalorder %s13, 9
      %p235 = pnand %p233, %p234
      %p236 = pneg %p235
      // Predicated region
      $region33: #{transition_forward.1} parent=5 // pred_check
        _
      $region34: #{transition_forward.1} parent=5 // pred_check_branch
        %238 = sbr.rel (%p235) target = $region36
      $region35: #{transition_forward.1} parent=5 // pred_region
        %s239 = ssub.s32 %s13, 1
        %s240 = sand.u32 %s49, 1
        %s241 = scalar_lea.sflag [#allocation3], %s240
        %s242 = sand.u32 %s49, 1
        %s243 = smul.addr %s242, 64
        %s244 = scalar_lea.vmem [#allocation2], %s243
        // Predicated region
        $region37: #{transition_forward.1} parent=35 // pred_check
          %p245 = pneg %p62
        $region38: #{transition_forward.1} parent=35 // pred_check_branch
          %247 = sbr.rel (%p245) target = $region40
        $region39: #{transition_forward.1} parent=35 // pred_region
          %249 = dma.done %s241, 1024
        $region40: #{transition_forward.1} parent=35 // pred_fallthru
          _
        %s250 = sand.u32 %s49, 1
        %s251 = scalar_lea.sflag [#allocation3], %s250
        %s252 = sand.u32 %s49, 1
        %s253 = smul.addr %s252, 64
        %s254 = scalar_lea.vmem [#allocation2], %s253
        %p255 = pneg %p62
        %p256 = pneg %p59
        %p257 = pneg %p83
        %p258 = pneg %p80
        %p259 = pneg %p104
        %p260 = pneg %p101
        %p261 = pneg %p125
        %p262 = pneg %p122
        %p263 = pneg %p155
        %p264 = pneg %p152
        %s265 = sand.u32 %s142, 1
        %s266 = sand.u32 %s142, 1
        %s267 = smul.addr %s266, 32
        %s268 = scalar_lea.vmem [#allocation4], %s267
        %v269 = vld [vmem:[%s244] sm:$0xff]
        %v270 = vld [vmem:[%s244 + $0x10] sm:$0xff]
        %v271 = vld [vmem:[%s244 + $0x20] sm:$0xff]
        %v272 = vld [vmem:[%s244 + $0x30] sm:$0xff]
        %s273 = scalar_lea.vmem %s244, 8 [#allocation2]
        %v274 = vld [vmem:[%s273] sm:$0xff]
        %v275 = vld [vmem:[%s273 + $0x10] sm:$0xff]
        %v276 = vld [vmem:[%s273 + $0x20] sm:$0xff]
        %v277 = vld [vmem:[%s273 + $0x30] sm:$0xff]
        %v278 = vadd.f32 %v269, %v274
        %v279 = vadd.f32 %v270, %v275
        %v280 = vadd.f32 %v271, %v276
        %v281 = vadd.f32 %v272, %v277
        %v282 = vld [vmem:[%s1] sm:$0xff]
        %vm283 = vcmask 64512
        %v285 = vsel %vm283, %v278, 0
        %v288 = vsel %vm283, %v279, 0
        %v291 = vsel %vm283, %v280, 0
        %v294 = vsel %vm283, %v281, 0
        %296 = vmatpush.msra.mxu0 0.0
        %297 = vmatpush.msra.mxu0 0.0
        %298 = vmatpush.msra.mxu0 0.0
        %299 = vmatpush.msra.mxu0 0.0
        %300 = vmatpush.msra.mxu0 0.0
        %301 = vmatpush.msra.mxu0 0.0
        %302 = vmatpush.msra.mxu0 0.0
        %303 = vmatpush.msra.mxu0 0.0
        %304 = vmatpush.msra.mxu0 0.0
        %305 = vmatpush.msra.mxu0 0.0
        %306 = vmatpush.msra.mxu0 0.0
        %307 = vmatpush.msra.mxu0 0.0
        %308 = vmatpush.msra.mxu0 0.0
        %309 = vmatpush.msra.mxu0 0.0
        %310 = vmatpush.msra.mxu0 0.0
        %311 = vmatpush.msra.mxu0 %v282
        %312 = vmatmul.f32.gmra.mxu0 %v285
        %v313 = vpop.f32.mrf.mxu0
        %v314 = vadd.f32 0.0, %v313
        %315 = vmatmul.f32.gmra.mxu0 %v288
        %v316 = vpop.f32.mrf.mxu0
        %v317 = vadd.f32 0.0, %v316
        %318 = vmatmul.f32.gmra.mxu0 %v291
        %v319 = vpop.f32.mrf.mxu0
        %v320 = vadd.f32 0.0, %v319
        %321 = vmatmul.f32.gmra.mxu0 %v294
        %v322 = vpop.f32.mrf.mxu0
        %v323 = vadd.f32 0.0, %v322
        %324 = vdwg.mxu0
        %v329 = vrot.slane %v314, 2
        %v330 = vrot.slane %v314, 4
        %v331 = vrot.slane %v314, 6
        %v332 = vrot.slane %v317, 2
        %v333 = vrot.slane %v317, 4
        %v334 = vrot.slane %v317, 6
        %v335 = vrot.slane %v320, 2
        %v336 = vrot.slane %v320, 4
        %v337 = vrot.slane %v320, 6
        %v338 = vrot.slane %v323, 2
        %v339 = vrot.slane %v323, 4
        %v340 = vrot.slane %v323, 6
        %v353 = vrot.slane %v314, 7
        %v354 = vrot.slane %v353, 2
        %v355 = vrot.slane %v329, 7
        %v356 = vrot.slane %v355, 2
        %v357 = vrot.slane %v330, 7
        %v358 = vrot.slane %v357, 2
        %v359 = vrot.slane %v331, 7
        %v360 = vrot.slane %v359, 2
        %v361 = vrot.slane %v317, 7
        %v362 = vrot.slane %v361, 2
        %v363 = vrot.slane %v332, 7
        %v364 = vrot.slane %v363, 2
        %v365 = vrot.slane %v333, 7
        %v366 = vrot.slane %v365, 2
        %v367 = vrot.slane %v334, 7
        %v368 = vrot.slane %v367, 2
        %v369 = vrot.slane %v320, 7
        %v370 = vrot.slane %v369, 2
        %v371 = vrot.slane %v335, 7
        %v372 = vrot.slane %v371, 2
        %v373 = vrot.slane %v336, 7
        %v374 = vrot.slane %v373, 2
        %v375 = vrot.slane %v337, 7
        %v376 = vrot.slane %v375, 2
        %v377 = vrot.slane %v323, 7
        %v378 = vrot.slane %v377, 2
        %v379 = vrot.slane %v338, 7
        %v380 = vrot.slane %v379, 2
        %v381 = vrot.slane %v339, 7
        %v382 = vrot.slane %v381, 2
        %v383 = vrot.slane %v340, 7
        %v384 = vrot.slane %v383, 2
        %v401 = vadd.f32 %v314, %v354
        %v402 = vadd.f32 %v329, %v356
        %v403 = vadd.f32 %v330, %v358
        %v404 = vadd.f32 %v331, %v360
        %v405 = vadd.f32 %v317, %v362
        %v406 = vadd.f32 %v332, %v364
        %v407 = vadd.f32 %v333, %v366
        %v408 = vadd.f32 %v334, %v368
        %v409 = vadd.f32 %v320, %v370
        %v410 = vadd.f32 %v335, %v372
        %v411 = vadd.f32 %v336, %v374
        %v412 = vadd.f32 %v337, %v376
        %v413 = vadd.f32 %v323, %v378
        %v414 = vadd.f32 %v338, %v380
        %v415 = vadd.f32 %v339, %v382
        %v416 = vadd.f32 %v340, %v384
        %v417 = vld [vmem:[%s2] sm:$0xff]
        %vm434 = vcmask 1044484
        %v435 = vsel %vm434, %v401, %v401
        %vm436 = vcmask 1046534
        %v437 = vsel %vm436, %v401, %v435
        %v438 = vrot.slane %v402, 7
        %vm439 = vcmask 1041409
        %v440 = vsel %vm439, %v438, %v437
        %vm441 = vcmask 1043459
        %v442 = vsel %vm441, %v438, %v440
        %vm443 = vcmask 1045509
        %v444 = vsel %vm443, %v438, %v442
        %vm445 = vcmask 1047559
        %v446 = vsel %vm445, %v438, %v444
        %v447 = vsel %vm434, %v403, %v403
        %v448 = vsel %vm436, %v403, %v447
        %v449 = vrot.slane %v404, 7
        %v450 = vsel %vm439, %v449, %v448
        %v451 = vsel %vm441, %v449, %v450
        %v452 = vsel %vm443, %v449, %v451
        %v453 = vsel %vm445, %v449, %v452
        %v454 = vsel %vm434, %v405, %v405
        %v455 = vsel %vm436, %v405, %v454
        %v456 = vrot.slane %v406, 7
        %v457 = vsel %vm439, %v456, %v455
        %v458 = vsel %vm441, %v456, %v457
        %v459 = vsel %vm443, %v456, %v458
        %v460 = vsel %vm445, %v456, %v459
        %v461 = vsel %vm434, %v407, %v407
        %v462 = vsel %vm436, %v407, %v461
        %v463 = vrot.slane %v408, 7
        %v464 = vsel %vm439, %v463, %v462
        %v465 = vsel %vm441, %v463, %v464
        %v466 = vsel %vm443, %v463, %v465
        %v467 = vsel %vm445, %v463, %v466
        %v468 = vsel %vm434, %v409, %v409
        %v469 = vsel %vm436, %v409, %v468
        %v470 = vrot.slane %v410, 7
        %v471 = vsel %vm439, %v470, %v469
        %v472 = vsel %vm441, %v470, %v471
        %v473 = vsel %vm443, %v470, %v472
        %v474 = vsel %vm445, %v470, %v473
        %v475 = vsel %vm434, %v411, %v411
        %v476 = vsel %vm436, %v411, %v475
        %v477 = vrot.slane %v412, 7
        %v478 = vsel %vm439, %v477, %v476
        %v479 = vsel %vm441, %v477, %v478
        %v480 = vsel %vm443, %v477, %v479
        %v481 = vsel %vm445, %v477, %v480
        %v482 = vsel %vm434, %v413, %v413
        %v483 = vsel %vm436, %v413, %v482
        %v484 = vrot.slane %v414, 7
        %v485 = vsel %vm439, %v484, %v483
        %v486 = vsel %vm441, %v484, %v485
        %v487 = vsel %vm443, %v484, %v486
        %v488 = vsel %vm445, %v484, %v487
        %v489 = vsel %vm434, %v415, %v415
        %v490 = vsel %vm436, %v415, %v489
        %v491 = vrot.slane %v416, 7
        %v492 = vsel %vm439, %v491, %v490
        %v493 = vsel %vm441, %v491, %v492
        %v494 = vsel %vm443, %v491, %v493
        %v495 = vsel %vm445, %v491, %v494
        %v504 = vrot.slane %v460, 4
        %vm505 = vcmask 1047556
        %v506 = vsel %vm505, %v504, %v446
        %v508 = vunpack.c.l.s4 1934713408
        %v509 = vunpack.c.0.s8 %v508
        %v510 = vperm.slane %v506, %v509
        %v511 = vrot.slane %v510, 4
        %v512 = vsel %vm505, 0.0, %v511
        %v513 = vrot.slane %v488, 4
        %v514 = vsel %vm505, %v513, %v474
        %v516 = vunpack.c.l.s4 1934713408
        %v517 = vunpack.c.0.s8 %v516
        %v518 = vperm.slane %v514, %v517
        %v519 = vrot.slane %v518, 4
        %v520 = vsel %vm505, 0.0, %v519
        %v521 = vrot.slane %v467, 4
        %v522 = vsel %vm505, %v521, %v453
        %v524 = vunpack.c.l.s4 1934713408
        %v525 = vunpack.c.0.s8 %v524
        %v526 = vperm.slane %v522, %v525
        %v527 = vrot.slane %v526, 4
        %v528 = vsel %vm505, 0.0, %v527
        %v529 = vrot.slane %v495, 4
        %v530 = vsel %vm505, %v529, %v481
        %v532 = vunpack.c.l.s4 1934713408
        %v533 = vunpack.c.0.s8 %v532
        %v534 = vperm.slane %v530, %v533
        %v535 = vrot.slane %v534, 4
        %v536 = vsel %vm505, 0.0, %v535
        %539 = vst [vmem:[#allocation1] ss:$4 sm:$0xff] %v510
        %s540 = scalar_lea.vmem [#allocation1], 1
        %541 = vst [vmem:[%s540] ss:$4 sm:$0xff] %v518
        %v542 = vld.sshfl [vmem:[#allocation1] sm:$0xff pattern:$0x73625140]
        %546 = vst [vmem:[#allocation1] ss:$4 sm:$0xff] %v512
        %s547 = scalar_lea.vmem [#allocation1], 1
        %548 = vst [vmem:[%s547] ss:$4 sm:$0xff] %v520
        %v549 = vld.sshfl [vmem:[#allocation1] sm:$0xff pattern:$0x73625140]
        %550 = vrot.lane.b32.xlu0 %v549, 4
        %v551 = vpop.permute.xlu0 %550
        %555 = vst [vmem:[#allocation1] ss:$4 sm:$0xff] %v526
        %s556 = scalar_lea.vmem [#allocation1], 1
        %557 = vst [vmem:[%s556] ss:$4 sm:$0xff] %v534
        %v558 = vld.sshfl [vmem:[#allocation1] sm:$0xff pattern:$0x73625140]
        %559 = vrot.lane.b32.xlu0 %v558, 8
        %v560 = vpop.permute.xlu0 %559
        %564 = vst [vmem:[#allocation1] ss:$4 sm:$0xff] %v528
        %s565 = scalar_lea.vmem [#allocation1], 1
        %566 = vst [vmem:[%s565] ss:$4 sm:$0xff] %v536
        %v567 = vld.sshfl [vmem:[#allocation1] sm:$0xff pattern:$0x73625140]
        %568 = vrot.lane.b32.xlu0 %v567, 12
        %v569 = vpop.permute.xlu0 %568
        %vm571 = vcmask 31744
        %v572 = vsel %vm571, %v542, %v551
        %v573 = vsel %vm283, %v572, %v560
        %vm574 = vcmask 97280
        %v575 = vsel %vm574, %v573, %v569
        %v576 = vld [vmem:[%s3] sm:$0xff]
        %578 = vset.pattern.permute.xlu0 0
        %579 = vperm.xlu0 %578, %v576
        %v580 = vpop.permute.xlu0 %579
        %v583 = vsel %vm571, %v417, 0
        %vm585 = vcmask 1043456
        %v587 = vsel %vm585, %v575, 0
        %589 = vmatpush.msra.mxu0 0.0
        %590 = vmatpush.msra.mxu0 0.0
        %591 = vmatpush.msra.mxu0 0.0
        %592 = vmatpush.msra.mxu0 0.0
        %593 = vmatpush.msra.mxu0 0.0
        %594 = vmatpush.msra.mxu0 0.0
        %595 = vmatpush.msra.mxu0 0.0
        %596 = vmatpush.msra.mxu0 0.0
        %597 = vmatpush.msra.mxu0 0.0
        %598 = vmatpush.msra.mxu0 0.0
        %599 = vmatpush.msra.mxu0 0.0
        %600 = vmatpush.msra.mxu0 0.0
        %601 = vmatpush.msra.mxu0 0.0
        %602 = vmatpush.msra.mxu0 0.0
        %603 = vmatpush.msra.mxu0 0.0
        %604 = vmatpush.msra.mxu0 %v587
        %605 = vmatmul.f32.gmra.mxu0 %v583
        %v606 = vpop.f32.mrf.mxu0
        %v607 = vadd.f32 %v580, %v606
        %608 = vdwg.mxu0
        %610 = vrot.lane.b32.xlu0 %v607, 124
        %v611 = vpop.permute.xlu0 %610
        %613 = vrot.lane.b32.xlu0 %v607, 120
        %v614 = vpop.permute.xlu0 %613
        %616 = vrot.lane.b32.xlu0 %v607, 116
        %v617 = vpop.permute.xlu0 %616
        %v619 = vrot.slane %v614, 4
        %v620 = vsel %vm505, %v619, %v607
        %v621 = vrot.slane %v607, 4
        %v622 = vsel %vm505, %v614, %v621
        %v624 = vunpack.c.l.s4 1983009808
        %v625 = vunpack.c.0.s8 %v624
        %v626 = vperm.slane %v620, %v625
        %v628 = vunpack.c.l.s4 1983009808
        %v629 = vunpack.c.0.s8 %v628
        %v630 = vperm.slane %v622, %v629
        %v631 = vrot.slane %v617, 4
        %v632 = vsel %vm505, %v631, %v611
        %v633 = vrot.slane %v611, 4
        %v634 = vsel %vm505, %v617, %v633
        %v636 = vunpack.c.l.s4 1983009808
        %v637 = vunpack.c.0.s8 %v636
        %v638 = vperm.slane %v632, %v637
        %v640 = vunpack.c.l.s4 1983009808
        %v641 = vunpack.c.0.s8 %v640
        %v642 = vperm.slane %v634, %v641
        %v643 = vrot.slane %v638, 4
        %v644 = vsel %vm505, %v643, %v626
        %v645 = vrot.slane %v626, 4
        %v646 = vsel %vm505, %v638, %v645
        %v648 = vunpack.c.l.s4 1934713408
        %v649 = vunpack.c.0.s8 %v648
        %v650 = vperm.slane %v644, %v649
        %v652 = vunpack.c.l.s4 1934713408
        %v653 = vunpack.c.0.s8 %v652
        %v654 = vperm.slane %v646, %v653
        %v655 = vrot.slane %v642, 4
        %v656 = vsel %vm505, %v655, %v630
        %v657 = vrot.slane %v630, 4
        %v658 = vsel %vm505, %v642, %v657
        %v660 = vunpack.c.l.s4 1934713408
        %v661 = vunpack.c.0.s8 %v660
        %v662 = vperm.slane %v656, %v661
        %v664 = vunpack.c.l.s4 1934713408
        %v665 = vunpack.c.0.s8 %v664
        %v666 = vperm.slane %v658, %v665
        %v667 = vrot.slane %v650, 4
        %v668 = vsel %vm505, 0.0, %v667
        %v669 = vrot.slane %v654, 4
        %v670 = vsel %vm505, 0.0, %v669
        %v671 = vrot.slane %v662, 4
        %v672 = vsel %vm505, 0.0, %v671
        %v673 = vrot.slane %v666, 4
        %v674 = vsel %vm505, 0.0, %v673
        %vm675 = vcmask 27648
        %676 = vst.msk [vmem:[%s268] sm:$0xf] %vm675, %v650
        %677 = vst.msk [vmem:[%s268 + $0x4] sm:$0xf] %vm675, %v668
        %678 = vst.msk [vmem:[%s268 + $0x8] sm:$0xf] %vm675, %v654
        %679 = vst.msk [vmem:[%s268 + $0xc] sm:$0xf] %vm675, %v670
        %680 = vst.msk [vmem:[%s268 + $0x10] sm:$0xf] %vm675, %v662
        %681 = vst.msk [vmem:[%s268 + $0x14] sm:$0xf] %vm675, %v672
        %682 = vst.msk [vmem:[%s268 + $0x18] sm:$0xf] %vm675, %v666
        %683 = vst.msk [vmem:[%s268 + $0x1c] sm:$0xf] %vm675, %v674
        %s684 = sand.u32 %s142, 1
        %s685 = sand.u32 %s142, 1
        %s686 = smul.addr %s685, 32
        %s687 = scalar_lea.vmem [#allocation4], %s686
        // Predicated region
        $region41: #{transition_forward.1} parent=35 // pred_check
          %p688 = pneg %p152
        $region42: #{transition_forward.1} parent=35 // pred_check_branch
          %690 = sbr.rel (%p688) target = $region44
        $region43: #{transition_forward.1} parent=35 // pred_region
          %s691 = sadd.s32 %s25, %s24
          %s692 = smul.addr %s23, 32
          %s693 = sadd.s32 %s691, %s692
          %s694 = smul.addr %s693, 4
          %s695 = scalar_lea.vmem %s4, %s694
          // Predicated region
          $region45: #{transition_forward.1} parent=43 // pred_check
            _
          $region46: #{transition_forward.1} parent=43 // pred_check_branch
            %697 = sbr.rel (0) target = $region48
          $region47: #{transition_forward.1} parent=43 // pred_region
            // Predicated region
            $region49: #{transition_forward.1} parent=47 // pred_check
              _
            $region50: #{transition_forward.1} parent=47 // pred_check_branch
              %699 = sbr.rel target = $region52
            $region51: #{transition_forward.1} parent=47 // pred_region
              // Predicated region
              $region64: #{transition_forward.1} parent=51 // pred_check
                _
              $region65: #{transition_forward.1} parent=51 // pred_check_branch
                %729 = sbr.rel (0) target = $region67
              $region66: #{transition_forward.1} parent=51 // pred_region
                loop: start=0, step=1, limit=1
                $region68: #{transition_forward.1} parent=66 // loop_pre_header
                  _
                $region69: #{transition_forward.1} parent=66 // loop_header
                  %s731 = sphi 0, %s735
                  %p732 = scmp.ge.s32.totalorder %s731, 1
                  %s736 = sphi %s687, %s687
                  %s737 = sphi %s695, %s695
                $region70: #{transition_forward.1} parent=66 // loop_header_branch
                  %734 = sbr.rel (%p732) target = $region74
                $region71: #{transition_forward.1} parent=66 // loop_body
                  _
                $region72: #{transition_forward.1} parent=66 // loop_footer
                  %s735 = sadd.s32 1, %s731
                $region73: #{transition_forward.1} parent=66 // loop_footer_branch
                  %730 = sbr.rel target = $region69
                $region74: #{transition_forward.1} parent=66 // loop_exit
                  _
                %s739 = ssub.s32 16, 1
                loop: start=0, step=1, limit=1
                $region75: #{transition_forward.1} parent=66 // loop_pre_header
                  _
                $region76: #{transition_forward.1} parent=66 // loop_header
                  %s741 = sphi 0, %s745
                  %p742 = scmp.ge.s32.totalorder %s741, 1
                  %s746 = sphi %s687, %s687
                  %s747 = sphi %s695, %s695
                $region77: #{transition_forward.1} parent=66 // loop_header_branch
                  %744 = sbr.rel (%p742) target = $region81
                $region78: #{transition_forward.1} parent=66 // loop_body
                  %v748 = vld [vmem:[%s746] sm:%s739]
                  %749 = vst [vmem:[%s747] sm:%s739] %v748
                  %v750 = vld [vmem:[%s746 + $0x4] sm:%s739]
                  %751 = vst [vmem:[%s747 + $0x10] sm:%s739] %v750
                  %v752 = vld [vmem:[%s746 + $0x8] sm:%s739]
                  %753 = vst [vmem:[%s747 + $0x20] sm:%s739] %v752
                  %v754 = vld [vmem:[%s746 + $0xc] sm:%s739]
                  %755 = vst [vmem:[%s747 + $0x30] sm:%s739] %v754
                  %v756 = vld [vmem:[%s746 + $0x10] sm:%s739]
                  %757 = vst [vmem:[%s747 + $0x40] sm:%s739] %v756
                  %v758 = vld [vmem:[%s746 + $0x14] sm:%s739]
                  %759 = vst [vmem:[%s747 + $0x50] sm:%s739] %v758
                  %v760 = vld [vmem:[%s746 + $0x18] sm:%s739]
                  %761 = vst [vmem:[%s747 + $0x60] sm:%s739] %v760
                  %v762 = vld [vmem:[%s746 + $0x1c] sm:%s739]
                  %763 = vst [vmem:[%s747 + $0x70] sm:%s739] %v762
                $region79: #{transition_forward.1} parent=66 // loop_footer
                  %s745 = sadd.s32 1, %s741
                $region80: #{transition_forward.1} parent=66 // loop_footer_branch
                  %740 = sbr.rel target = $region76
                $region81: #{transition_forward.1} parent=66 // loop_exit
                  _
              $region67: #{transition_forward.1} parent=51 // pred_fallthru
                _
            $region52: #{transition_forward.1} parent=47 // pred_fallthru
              _
            // Predicated region
            $region53: #{transition_forward.1} parent=47 // pred_check
              _
            $region54: #{transition_forward.1} parent=47 // pred_check_branch
              %701 = sbr.rel (0) target = $region56
            $region55: #{transition_forward.1} parent=47 // pred_region
              %s703 = ssub.s32 16, 1
              loop: start=0, step=1, limit=1
              $region57: #{transition_forward.1} parent=55 // loop_pre_header
                _
              $region58: #{transition_forward.1} parent=55 // loop_header
                %s705 = sphi 0, %s709
                %p706 = scmp.ge.s32.totalorder %s705, 1
                %s710 = sphi %s687, %s687
                %s711 = sphi %s695, %s695
              $region59: #{transition_forward.1} parent=55 // loop_header_branch
                %708 = sbr.rel (%p706) target = $region63
              $region60: #{transition_forward.1} parent=55 // loop_body
                %v712 = vld [vmem:[%s710] sm:%s703]
                %713 = vst [vmem:[%s711] sm:%s703] %v712
                %v714 = vld [vmem:[%s710 + $0x4] sm:%s703]
                %715 = vst [vmem:[%s711 + $0x10] sm:%s703] %v714
                %v716 = vld [vmem:[%s710 + $0x8] sm:%s703]
                %717 = vst [vmem:[%s711 + $0x20] sm:%s703] %v716
                %v718 = vld [vmem:[%s710 + $0xc] sm:%s703]
                %719 = vst [vmem:[%s711 + $0x30] sm:%s703] %v718
                %v720 = vld [vmem:[%s710 + $0x10] sm:%s703]
                %721 = vst [vmem:[%s711 + $0x40] sm:%s703] %v720
                %v722 = vld [vmem:[%s710 + $0x14] sm:%s703]
                %723 = vst [vmem:[%s711 + $0x50] sm:%s703] %v722
                %v724 = vld [vmem:[%s710 + $0x18] sm:%s703]
                %725 = vst [vmem:[%s711 + $0x60] sm:%s703] %v724
                %v726 = vld [vmem:[%s710 + $0x1c] sm:%s703]
                %727 = vst [vmem:[%s711 + $0x70] sm:%s703] %v726
              $region61: #{transition_forward.1} parent=55 // loop_footer
                %s709 = sadd.s32 1, %s705
              $region62: #{transition_forward.1} parent=55 // loop_footer_branch
                %704 = sbr.rel target = $region58
              $region63: #{transition_forward.1} parent=55 // loop_exit
                _
            $region56: #{transition_forward.1} parent=47 // pred_fallthru
              _
          $region48: #{transition_forward.1} parent=43 // pred_fallthru
            _
          %764 = vnop
        $region44: #{transition_forward.1} parent=35 // pred_fallthru
          _
      $region36: #{transition_forward.1} parent=5 // pred_fallthru
        _
      %p765 = scmp.le.s32.totalorder 2, %s13
      // Predicated region
      $region82: #{transition_forward.1} parent=5 // pred_check
        %p766 = pneg %p765
      $region83: #{transition_forward.1} parent=5 // pred_check_branch
        %768 = sbr.rel (%p766) target = $region85
      $region84: #{transition_forward.1} parent=5 // pred_region
        %s769 = ssub.s32 %s13, 2
        // Predicated region
        $region86: #{transition_forward.1} parent=84 // pred_check
          %p770 = pneg %p158
        $region87: #{transition_forward.1} parent=84 // pred_check_branch
          %772 = sbr.rel (%p770) target = $region89
        $region88: #{transition_forward.1} parent=84 // pred_region
          %s773 = sand.u32 %s143, 1
          %s774 = sand.u32 %s143, 1
          %s775 = smul.addr %s774, 32
          %s776 = scalar_lea.vmem [#allocation4], %s775
        $region89: #{transition_forward.1} parent=84 // pred_fallthru
          _
      $region85: #{transition_forward.1} parent=5 // pred_fallthru
        _
    $region6: #{transition_forward.1} parent=1 // loop_footer
      %s17 = sadd.s32 1, %s13
    $region7: #{transition_forward.1} parent=1 // loop_footer_branch
      %12 = sbr.rel target = $region3
    $region8: #{transition_forward.1} parent=1 // loop_exit
      _
    %777 = vsyncpa [#allocation3], 1
    %s778 = scalar_lea.sflag [#allocation3], 1
    %779 = vsyncpa %s778, 1

</llo_original>
